<compile_context>
chip_gen: v6e
topology: v6e:2x2x1
jax: 0.10.0
libtpu: 0.0.40
codegen_flags: <defaults>
</compile_context>

<pallas_src>
import jax
import jax.numpy as jnp
from jax.experimental import pallas as pl
from jax.experimental.pallas import tpu as pltpu


def _round_up(v, m):
    return (v + m - 1) // m * m


def _vmem_limit_bytes():
    """Generation-aware VMEM budget (~75% of physical)."""
    try:
        cap = int(pltpu.get_tpu_info().vmem_capacity_bytes)
    except Exception:
        cap = 64 * 1024 * 1024          # conservative (v7x-sized) fallback
    return (cap * 3) // 4               # ~96 MiB v5e/v6e, ~48 MiB v7x


def neck_kernel(x_ref, w_ref, scale_ref, shift_ref, alpha_ref, o_ref):
    # Linear on the MXU: (TM, K) bf16 @ (K, TN) bf16 -> f32 accumulation.
    z = jnp.dot(x_ref[...], w_ref[...], preferred_element_type=jnp.float32)
    # BatchNorm1d (eval) folded to a per-channel affine, applied in f32 epilogue.
    z = z * scale_ref[...] + shift_ref[...]
    # PReLU with a single shared slope (PyTorch default), read from SMEM.
    a = alpha_ref[0]
    o_ref[...] = jnp.where(z > 0, z, a * z).astype(o_ref.dtype)


def prepare_neck_params(w, b, gamma, beta, running_mean, running_var, alpha,
                        eps=1e-5):
    """Fold BN (eval) into per-channel (scale, shift) and pad to lane-aligned
    shapes.  Call ONCE at model load -- hoisted out of the per-forward path."""
    in_f, out_f = w.shape
    in_pad = _round_up(in_f, 128)
    out_pad = _round_up(out_f, 128)

    scale = (gamma.astype(jnp.float32)
             / jnp.sqrt(running_var.astype(jnp.float32) + eps))          # (out,)
    shift = (b.astype(jnp.float32) * scale
             + beta.astype(jnp.float32)
             - running_mean.astype(jnp.float32) * scale)                 # (out,)

    # Keep the ORIGINAL weight in bf16 (BN scale stays in the f32 epilogue).
    w_p = jnp.zeros((in_pad, out_pad), jnp.bfloat16)
    w_p = w_p.at[:in_f, :out_f].set(w.astype(jnp.bfloat16))
    scale_p = jnp.zeros((1, out_pad), jnp.float32).at[0, :out_f].set(scale)
    shift_p = jnp.zeros((1, out_pad), jnp.float32).at[0, :out_f].set(shift)
    alpha_s = jnp.asarray(alpha, jnp.float32).reshape(1)                 # SMEM

    return dict(w_p=w_p, scale_p=scale_p, shift_p=shift_p, alpha_s=alpha_s,
                in_f=in_f, out_f=out_f, in_pad=in_pad, out_pad=out_pad)


def _call_neck(x_p, params, *, tm, tn, grid_m, grid_n, vmem_limit,
               single_buffer_resident):
    n_pad, in_pad = x_p.shape
    out_pad = params["out_pad"]

    def resident_spec(shape, index_map):
        # Grid-invariant blocks (constant index_map) need only one buffer.
        if single_buffer_resident:
            return pl.BlockSpec(shape, index_map, pipeline_mode=pl.Buffered(1))
        return pl.BlockSpec(shape, index_map)

    cost = pl.CostEstimate(
        flops=2 * n_pad * in_pad * out_pad,
        transcendentals=0,
        bytes_accessed=(x_p.size * 2 + params["w_p"].size * 2
                        + n_pad * out_pad * 2 + 2 * out_pad * 4),
    )

    return pl.pallas_call(
        neck_kernel,
        out_shape=jax.ShapeDtypeStruct((n_pad, out_pad), jnp.bfloat16),
        grid=(grid_m, grid_n),
        in_specs=[
            pl.BlockSpec((tm, in_pad), lambda i, j: (i, 0)),        # x tile
            resident_spec((in_pad, tn), lambda i, j: (0, j)),       # weight
            resident_spec((1, tn), lambda i, j: (0, j)),            # BN scale
            resident_spec((1, tn), lambda i, j: (0, j)),            # BN shift
            pl.BlockSpec(memory_space=pltpu.MemorySpace.SMEM),      # PReLU slope
        ],
        out_specs=pl.BlockSpec((tm, tn), lambda i, j: (i, j)),
        compiler_params=pltpu.CompilerParams(
            dimension_semantics=("parallel", "parallel"),
            vmem_limit_bytes=vmem_limit,
        ),
        cost_estimate=cost,
    )(x_p, params["w_p"], params["scale_p"], params["shift_p"],
      params["alpha_s"])


def neck_forward(x, params):
    """x: (N, in_features). Returns bf16 (N, out_features)."""
    n, in_f = x.shape
    assert in_f == params["in_f"]
    in_pad, out_pad, out_f = params["in_pad"], params["out_pad"], params["out_f"]

    vmem_limit = _vmem_limit_bytes()

    # Batch tile: large (512) for the mem-bound roofline, multiple of 8.
    tm = min(512, _round_up(n, 8))
    n_pad = _round_up(n, tm)
    grid_m = n_pad // tm

    # N tile: keep the whole weight resident when it fits the budget
    # (single-buffered); otherwise tile output columns in multiples of 256
    # (full-width for the 256-wide v6e/v7x MXU) -- required on v7x's 64 MiB VMEM.
    budget_w = vmem_limit // 2            # leave room for x/out double buffers
    if in_pad * out_pad * 2 <= budget_w:
        tn = out_pad
    else:
        tn = 256
        while (tn * 2 <= out_pad) and (in_pad * (tn * 2) * 2 <= budget_w):
            tn *= 2
        tn = min(tn, out_pad)
    grid_n = out_pad // tn

    # Pad activations to lane-aligned bf16 (zeros are exact no-ops for the dot).
    x_p = jnp.zeros((n_pad, in_pad), jnp.bfloat16)
    x_p = x_p.at[:n, :in_f].set(x.astype(jnp.bfloat16))

    common = dict(tm=tm, tn=tn, grid_m=grid_m, grid_n=grid_n,
                  vmem_limit=vmem_limit)
    try:
        out_p = _call_neck(x_p, params, single_buffer_resident=(grid_n == 1),
                           **common)
    except Exception:
        # Fallback: default double-buffering if Buffered(1) is rejected.
        out_p = _call_neck(x_p, params, single_buffer_resident=False, **common)

    # TODO(synk): for out_f << out_pad, prefer returning the padded slab (or
    # fusing this slice into the consumer) to avoid an extra HBM copy.
    return out_p[:n, :out_f]


def neck_reference(x, w, b, gamma, beta, running_mean, running_var, alpha,
                   eps=1e-5):
    z = x @ w + b
    z = (z - running_mean) / jnp.sqrt(running_var + eps) * gamma + beta
    return jnp.where(z > 0, z, alpha * z)


if __name__ == "__main__":
    key = jax.random.PRNGKey(0)
    k_x, k_w, k_b, k_g, k_bt, k_m, k_v = jax.random.split(key, 7)

    batch = 8
    in_features = 32
    out_features = 16

    x = jax.random.normal(k_x, (batch, in_features), jnp.float32)

    # Deterministic synthetic parameters (shapes per nn.Linear / BatchNorm1d).
    w = jax.random.normal(k_w, (in_features, out_features), jnp.float32) * 0.1
    b = jax.random.normal(k_b, (out_features,), jnp.float32) * 0.1
    gamma = 1.0 + 0.1 * jax.random.normal(k_g, (out_features,), jnp.float32)
    beta = 0.1 * jax.random.normal(k_bt, (out_features,), jnp.float32)
    running_mean = 0.1 * jax.random.normal(k_m, (out_features,), jnp.float32)
    running_var = jnp.abs(jax.random.normal(k_v, (out_features,), jnp.float32)) + 0.5
    alpha = jnp.float32(0.25)  # PReLU default init

    # One-time parameter preparation (hoisted out of the forward path).
    params = prepare_neck_params(w, b, gamma, beta, running_mean, running_var,
                                 alpha)

    out = neck_forward(x, params)
    out = jax.block_until_ready(out)

    ref = neck_reference(x, w, b, gamma, beta, running_mean, running_var, alpha)
    assert out.shape == (batch, out_features)
    # bf16 MXU inputs + bf16 output (f32 accumulation / f32 BN-PReLU epilogue).
    assert jnp.allclose(out.astype(jnp.float32), ref, atol=2e-2, rtol=2e-2), \
        "mismatch vs reference"

    print("KERNEL_OK")
</pallas_src>

<mosaic_0001>
module attributes {stable_mosaic.version = 11 : i64} {
  func.func @neck_kernel(%arg0: i32, %arg1: i32, %arg2: memref<8x128xbf16, #tpu.memory_space<vmem>>, %arg3: memref<128x128xbf16, #tpu.memory_space<vmem>>, %arg4: memref<1x128xf32, #tpu.memory_space<vmem>>, %arg5: memref<1x128xf32, #tpu.memory_space<vmem>>, %arg6: memref<1xf32, #tpu.memory_space<smem>>, %arg7: memref<8x128xbf16, #tpu.memory_space<vmem>>) attributes {dimension_semantics = [#tpu.dimension_semantics<parallel>, #tpu.dimension_semantics<parallel>], iteration_bounds = array<i64: 1, 1>, scalar_prefetch = 0 : i64, scratch_operands = 0 : i64, tpu.core_type = #tpu.core_type<tc>, window_params = [{transform_indices = @transform_0, window_bounds = array<i64: 8, 128>}, {pipeline_mode = #tpu.pipeline_mode<synchronous>, transform_indices = @transform_1, window_bounds = array<i64: 128, 128>}, {pipeline_mode = #tpu.pipeline_mode<synchronous>, transform_indices = @transform_2, window_bounds = array<i64: 1, 128>}, {pipeline_mode = #tpu.pipeline_mode<synchronous>, transform_indices = @transform_3, window_bounds = array<i64: 1, 128>}, {transform_indices = @transform_4, window_bounds = array<i64: 1>}, {transform_indices = @transform_5, window_bounds = array<i64: 8, 128>}]} {
    %c0 = arith.constant 0 : index
    %c0_0 = arith.constant 0 : index
    %0 = vector.load %arg2[%c0, %c0_0] : memref<8x128xbf16, #tpu.memory_space<vmem>>, vector<8x128xbf16>
    %c0_1 = arith.constant 0 : index
    %c0_2 = arith.constant 0 : index
    %1 = vector.load %arg3[%c0_1, %c0_2] : memref<128x128xbf16, #tpu.memory_space<vmem>>, vector<128x128xbf16>
    %cst = arith.constant dense<0.000000e+00> : vector<8x128xf32>
    %2 = tpu.matmul %0, %1, %cst {dimension_numbers = #tpu.dot_dimension_numbers<[1], [0], [0], [1], [0, 0, 1, 1], [], []>} : vector<8x128xbf16>, vector<128x128xbf16>, vector<8x128xf32> -> vector<8x128xf32>
    %c0_3 = arith.constant 0 : index
    %c0_4 = arith.constant 0 : index
    %3 = vector.load %arg4[%c0_3, %c0_4] : memref<1x128xf32, #tpu.memory_space<vmem>>, vector<1x128xf32>
    %4 = vector.broadcast %3 : vector<1x128xf32> to vector<8x128xf32>
    %5 = arith.mulf %2, %4 : vector<8x128xf32>
    %c0_5 = arith.constant 0 : index
    %c0_6 = arith.constant 0 : index
    %6 = vector.load %arg5[%c0_5, %c0_6] : memref<1x128xf32, #tpu.memory_space<vmem>>, vector<1x128xf32>
    %7 = vector.broadcast %6 : vector<1x128xf32> to vector<8x128xf32>
    %8 = arith.addf %5, %7 : vector<8x128xf32>
    %c0_7 = arith.constant 0 : index
    %9 = memref.load %arg6[%c0_7] : memref<1xf32, #tpu.memory_space<smem>>
    %cst_8 = arith.constant 0.000000e+00 : f32
    %10 = vector.broadcast %cst_8 : f32 to vector<8x128xf32>
    %11 = arith.cmpf ogt, %8, %10 : vector<8x128xf32>
    %12 = vector.broadcast %9 : f32 to vector<8x128xf32>
    %13 = arith.mulf %12, %8 : vector<8x128xf32>
    %14 = arith.select %11, %8, %13 : vector<8x128xi1>, vector<8x128xf32>
    %15 = arith.truncf %14 : vector<8x128xf32> to vector<8x128xbf16>
    %c0_9 = arith.constant 0 : index
    %c0_10 = arith.constant 0 : index
    %16 = vector.load %arg7[%c0_9, %c0_10] : memref<8x128xbf16, #tpu.memory_space<vmem>>, vector<8x128xbf16>
    tpu.vector_store %arg7[%c0_9, %c0_10], %15 {strides = array<i32>} : memref<8x128xbf16, #tpu.memory_space<vmem>>, vector<8x128xbf16>,
    return
  }
  func.func @transform_0(%arg0: i32, %arg1: i32) -> (i32, i32) {
    %c0_i32 = arith.constant 0 : i32
    %c0_i32_0 = arith.constant 0 : i32
    return %arg0, %c0_i32 : i32, i32
  }
  func.func @transform_1(%arg0: i32, %arg1: i32) -> (i32, i32) {
    %c0_i32 = arith.constant 0 : i32
    %c0_i32_0 = arith.constant 0 : i32
    return %c0_i32, %arg1 : i32, i32
  }
  func.func @transform_2(%arg0: i32, %arg1: i32) -> (i32, i32) {
    %c0_i32 = arith.constant 0 : i32
    %c0_i32_0 = arith.constant 0 : i32
    return %c0_i32, %arg1 : i32, i32
  }
  func.func @transform_3(%arg0: i32, %arg1: i32) -> (i32, i32) {
    %c0_i32 = arith.constant 0 : i32
    %c0_i32_0 = arith.constant 0 : i32
    return %c0_i32, %arg1 : i32, i32
  }
  func.func @transform_4(%arg0: i32, %arg1: i32) -> i32 {
    %c0_i32 = arith.constant 0 : i32
    %c0_i32_0 = arith.constant 0 : i32
    return %c0_i32 : i32
  }
  func.func @transform_5(%arg0: i32, %arg1: i32) -> (i32, i32) {
    %c0_i32 = arith.constant 0 : i32
    return %arg0, %arg1 : i32, i32
  }
}

module attributes {stable_mosaic.version = 11 : i64} {
  func.func @neck_kernel(%arg0: i32, %arg1: i32, %arg2: memref<8x128xbf16, #tpu.memory_space<vmem>>, %arg3: memref<128x128xbf16, #tpu.memory_space<vmem>>, %arg4: memref<1x128xf32, #tpu.memory_space<vmem>>, %arg5: memref<1x128xf32, #tpu.memory_space<vmem>>, %arg6: memref<1xf32, #tpu.memory_space<smem>>, %arg7: memref<8x128xbf16, #tpu.memory_space<vmem>>) attributes {dimension_semantics = [#tpu.dimension_semantics<parallel>, #tpu.dimension_semantics<parallel>], iteration_bounds = array<i64: 1, 1>, scalar_prefetch = 0 : i64, scratch_operands = 0 : i64, tpu.core_type = #tpu.core_type<tc>, window_params = [{transform_indices = @transform_0, window_bounds = array<i64: 8, 128>}, {transform_indices = @transform_1, window_bounds = array<i64: 128, 128>}, {transform_indices = @transform_2, window_bounds = array<i64: 1, 128>}, {transform_indices = @transform_3, window_bounds = array<i64: 1, 128>}, {transform_indices = @transform_4, window_bounds = array<i64: 1>}, {transform_indices = @transform_5, window_bounds = array<i64: 8, 128>}]} {
    %c0 = arith.constant 0 : index
    %c0_0 = arith.constant 0 : index
    %0 = vector.load %arg2[%c0, %c0_0] : memref<8x128xbf16, #tpu.memory_space<vmem>>, vector<8x128xbf16>
    %c0_1 = arith.constant 0 : index
    %c0_2 = arith.constant 0 : index
    %1 = vector.load %arg3[%c0_1, %c0_2] : memref<128x128xbf16, #tpu.memory_space<vmem>>, vector<128x128xbf16>
    %cst = arith.constant dense<0.000000e+00> : vector<8x128xf32>
    %2 = tpu.matmul %0, %1, %cst {dimension_numbers = #tpu.dot_dimension_numbers<[1], [0], [0], [1], [0, 0, 1, 1], [], []>} : vector<8x128xbf16>, vector<128x128xbf16>, vector<8x128xf32> -> vector<8x128xf32>
    %c0_3 = arith.constant 0 : index
    %c0_4 = arith.constant 0 : index
    %3 = vector.load %arg4[%c0_3, %c0_4] : memref<1x128xf32, #tpu.memory_space<vmem>>, vector<1x128xf32>
    %4 = vector.broadcast %3 : vector<1x128xf32> to vector<8x128xf32>
    %5 = arith.mulf %2, %4 : vector<8x128xf32>
    %c0_5 = arith.constant 0 : index
    %c0_6 = arith.constant 0 : index
    %6 = vector.load %arg5[%c0_5, %c0_6] : memref<1x128xf32, #tpu.memory_space<vmem>>, vector<1x128xf32>
    %7 = vector.broadcast %6 : vector<1x128xf32> to vector<8x128xf32>
    %8 = arith.addf %5, %7 : vector<8x128xf32>
    %c0_7 = arith.constant 0 : index
    %9 = memref.load %arg6[%c0_7] : memref<1xf32, #tpu.memory_space<smem>>
    %cst_8 = arith.constant 0.000000e+00 : f32
    %10 = vector.broadcast %cst_8 : f32 to vector<8x128xf32>
    %11 = arith.cmpf ogt, %8, %10 : vector<8x128xf32>
    %12 = vector.broadcast %9 : f32 to vector<8x128xf32>
    %13 = arith.mulf %12, %8 : vector<8x128xf32>
    %14 = arith.select %11, %8, %13 : vector<8x128xi1>, vector<8x128xf32>
    %15 = arith.truncf %14 : vector<8x128xf32> to vector<8x128xbf16>
    %c0_9 = arith.constant 0 : index
    %c0_10 = arith.constant 0 : index
    %16 = vector.load %arg7[%c0_9, %c0_10] : memref<8x128xbf16, #tpu.memory_space<vmem>>, vector<8x128xbf16>
    tpu.vector_store %arg7[%c0_9, %c0_10], %15 {strides = array<i32>} : memref<8x128xbf16, #tpu.memory_space<vmem>>, vector<8x128xbf16>,
    return
  }
  func.func @transform_0(%arg0: i32, %arg1: i32) -> (i32, i32) {
    %c0_i32 = arith.constant 0 : i32
    %c0_i32_0 = arith.constant 0 : i32
    return %arg0, %c0_i32 : i32, i32
  }
  func.func @transform_1(%arg0: i32, %arg1: i32) -> (i32, i32) {
    %c0_i32 = arith.constant 0 : i32
    %c0_i32_0 = arith.constant 0 : i32
    return %c0_i32, %arg1 : i32, i32
  }
  func.func @transform_2(%arg0: i32, %arg1: i32) -> (i32, i32) {
    %c0_i32 = arith.constant 0 : i32
    %c0_i32_0 = arith.constant 0 : i32
    return %c0_i32, %arg1 : i32, i32
  }
  func.func @transform_3(%arg0: i32, %arg1: i32) -> (i32, i32) {
    %c0_i32 = arith.constant 0 : i32
    %c0_i32_0 = arith.constant 0 : i32
    return %c0_i32, %arg1 : i32, i32
  }
  func.func @transform_4(%arg0: i32, %arg1: i32) -> i32 {
    %c0_i32 = arith.constant 0 : i32
    %c0_i32_0 = arith.constant 0 : i32
    return %c0_i32 : i32
  }
  func.func @transform_5(%arg0: i32, %arg1: i32) -> (i32, i32) {
    %c0_i32 = arith.constant 0 : i32
    return %arg0, %arg1 : i32, i32
  }
}

</mosaic_0001>

<llo_original>
// kernel: tpu_custom_call.1
$region0: #{tpu_custom_call.1}
  #allocation0 [shape = 'u32[]', space=smem, size = 0x4, offset = 0x4, fixed_abs, tag = 'smem constant byte address 0x4 - core index']
  #allocation1 [shape = 'u32[144,128]{1,0:T(1,128)}', space=vmem, size = 0x12000, scoped, tag = 'internal scratch']
  #allocation2 [shape = 'f32[1]{0:T(128)S(6)}', space=smem, size = 0x200, scoped, tag = 'scoped memory for tpu_custom_call.1']
  %s0 = inlined_call_operand.hbm [shape: bf16[8,128], index: 0, kind: input, shape index: {}]
  %s1 = inlined_call_operand.hbm [shape: bf16[128,128], index: 1, kind: input, shape index: {}]
  %s2 = inlined_call_operand.vmem [shape: f32[1,128], index: 2, kind: input, shape index: {}]
  %s3 = inlined_call_operand.vmem [shape: f32[1,128], index: 3, kind: input, shape index: {}]
  %s4 = inlined_call_operand.<no memory space> [shape: f32[1], index: 4, kind: input, shape index: {}]
  %s5 = inlined_call_operand.hbm [shape: bf16[8,128], index: 5, kind: output, shape index: {}]
  %s6 = sld [smem:[#allocation0]]
  $region38: #{tpu_custom_call.1} parent=0
    _
  %s8 = ssub.s32 1, %s6
  %s9 = scalar_select 0, %s8, %s6
  %10 = sst [smem:[#allocation2]] %s4
  $region1: #{tpu_custom_call.1} parent=0
    #allocation3 [shape = 'u8[2048]{0}', space=vmem, size = 0x800, scoped, tag = 'input window, operand 0, single buffered']
    #allocation4 [shape = 's32[1]{0}', space=sflag, size = 0x4, scoped, tag = 'scoped memory for tpu_custom_call.1']
    #allocation5 [shape = 's32[1]{0}', space=sflag, size = 0x4, scoped, tag = 'scoped memory for tpu_custom_call.1']
    #allocation6 [shape = 'u8[32768]{0}', space=vmem, size = 0x8000, scoped, tag = 'input window, operand 1, single buffered']
    #allocation7 [shape = 's32[1]{0}', space=sflag, size = 0x4, scoped, tag = 'scoped memory for tpu_custom_call.1']
    #allocation8 [shape = 'u8[2048]{0}', space=vmem, size = 0x800, scoped, tag = 'output window, operand 0, single buffered']
    %11 = vsyncpa [#allocation4], 0
    %12 = vsyncpa [#allocation7], 0
    %13 = vsyncpa [#allocation5], 0
    // Predicated region
    $region2: #{tpu_custom_call.1} parent=1 // pred_check
      _
    $region3: #{tpu_custom_call.1} parent=1 // pred_check_branch
      %15 = sbr.rel (0) target = $region5
    $region4: #{tpu_custom_call.1} parent=1 // pred_region
      %s17 = ssub.s32 64, 64
      %18 = vsyncadd [#allocation4], %s17
      %s20 = sshll.u32 [#allocation3], 4
      %s21 = int_to_ptr.vmem [resolvable:$true] %s20
      %23 = dma.hbm_to_vmem [thread:$0]  %s0, 64, %s21, [#allocation4]
    $region5: #{tpu_custom_call.1} parent=1 // pred_fallthru
      _
    // Predicated region
    $region6: #{tpu_custom_call.1} parent=1 // pred_check
      _
    $region7: #{tpu_custom_call.1} parent=1 // pred_check_branch
      %25 = sbr.rel (0) target = $region9
    $region8: #{tpu_custom_call.1} parent=1 // pred_region
      %s27 = ssub.s32 1024, 1024
      %28 = vsyncadd [#allocation7], %s27
      %s29 = sshll.u32 [#allocation6], 4
      %s30 = int_to_ptr.vmem [resolvable:$true] %s29
      %35 = dma.hbm_to_vmem [thread:$0]  %s1, 1024, %s30, [#allocation7], 64, 64, 4
    $region9: #{tpu_custom_call.1} parent=1 // pred_fallthru
      _
    // Predicated region
    $region10: #{tpu_custom_call.1} parent=1 // pred_check
      _
    $region11: #{tpu_custom_call.1} parent=1 // pred_check_branch
      %37 = sbr.rel (0) target = $region13
    $region12: #{tpu_custom_call.1} parent=1 // pred_region
      _
    $region13: #{tpu_custom_call.1} parent=1 // pred_fallthru
      _
    // Predicated region
    $region14: #{tpu_custom_call.1} parent=1 // pred_check
      _
    $region15: #{tpu_custom_call.1} parent=1 // pred_check_branch
      %39 = sbr.rel (0) target = $region17
    $region16: #{tpu_custom_call.1} parent=1 // pred_region
      _
    $region17: #{tpu_custom_call.1} parent=1 // pred_fallthru
      _
    // Predicated region
    $region18: #{tpu_custom_call.1} parent=1 // pred_check
      _
    $region19: #{tpu_custom_call.1} parent=1 // pred_check_branch
      %41 = sbr.rel (0) target = $region21
    $region20: #{tpu_custom_call.1} parent=1 // pred_region
      _
    $region21: #{tpu_custom_call.1} parent=1 // pred_fallthru
      _
    // Predicated region
    $region22: #{tpu_custom_call.1} parent=1 // pred_check
      _
    $region23: #{tpu_custom_call.1} parent=1 // pred_check_branch
      %43 = sbr.rel (0) target = $region25
    $region24: #{tpu_custom_call.1} parent=1 // pred_region
      %44 = dma.done [#allocation4], 64
    $region25: #{tpu_custom_call.1} parent=1 // pred_fallthru
      _
    // Predicated region
    $region26: #{tpu_custom_call.1} parent=1 // pred_check
      _
    $region27: #{tpu_custom_call.1} parent=1 // pred_check_branch
      %46 = sbr.rel (0) target = $region29
    $region28: #{tpu_custom_call.1} parent=1 // pred_region
      %47 = dma.done [#allocation7], 1024
    $region29: #{tpu_custom_call.1} parent=1 // pred_fallthru
      _
    %v49 = vld [vmem:[#allocation3] sm:$0xf]
    %v50 = vld [vmem:[#allocation6] sm:$0xf]
    %v51 = vld [vmem:[#allocation6 + $0x4] sm:$0xf]
    %v52 = vld [vmem:[#allocation6 + $0x8] sm:$0xf]
    %v53 = vld [vmem:[#allocation6 + $0xc] sm:$0xf]
    %v54 = vld [vmem:[#allocation6 + $0x10] sm:$0xf]
    %v55 = vld [vmem:[#allocation6 + $0x14] sm:$0xf]
    %v56 = vld [vmem:[#allocation6 + $0x18] sm:$0xf]
    %v57 = vld [vmem:[#allocation6 + $0x1c] sm:$0xf]
    %v58 = vld [vmem:[#allocation6 + $0x20] sm:$0xf]
    %v59 = vld [vmem:[#allocation6 + $0x24] sm:$0xf]
    %v60 = vld [vmem:[#allocation6 + $0x28] sm:$0xf]
    %v61 = vld [vmem:[#allocation6 + $0x2c] sm:$0xf]
    %v62 = vld [vmem:[#allocation6 + $0x30] sm:$0xf]
    %v63 = vld [vmem:[#allocation6 + $0x34] sm:$0xf]
    %v64 = vld [vmem:[#allocation6 + $0x38] sm:$0xf]
    %v65 = vld [vmem:[#allocation6 + $0x3c] sm:$0xf]
    %v82 = vunpack.c.l.b16 %v50
    %v83 = vunpack.c.l.b16 %v51
    %v84 = vunpack.c.l.b16 %v52
    %v85 = vunpack.c.l.b16 %v53
    %v86 = vunpack.c.l.b16 %v54
    %v87 = vunpack.c.l.b16 %v55
    %v88 = vunpack.c.l.b16 %v56
    %v89 = vunpack.c.l.b16 %v57
    %v90 = vunpack.c.l.b16 %v58
    %v91 = vunpack.c.l.b16 %v59
    %v92 = vunpack.c.l.b16 %v60
    %v93 = vunpack.c.l.b16 %v61
    %v94 = vunpack.c.l.b16 %v62
    %v95 = vunpack.c.l.b16 %v63
    %v96 = vunpack.c.l.b16 %v64
    %v97 = vunpack.c.l.b16 %v65
    %v98 = vpack.c.b16 %v83, %v82
    %v99 = vpack.c.b16 %v85, %v84
    %v100 = vpack.c.b16 %v87, %v86
    %v101 = vpack.c.b16 %v89, %v88
    %v102 = vpack.c.b16 %v91, %v90
    %v103 = vpack.c.b16 %v93, %v92
    %v104 = vpack.c.b16 %v95, %v94
    %v105 = vpack.c.b16 %v97, %v96
    %114 = vmatprep.subr.bf16.mxu0 0
    %115 = vmatpush1.bf16.msra.mxu0 %v105
    %116 = vmatprep.subr.bf16.mxu0 0
    %117 = vmatpush1.bf16.msra.mxu0 %v104
    %118 = vmatprep.subr.bf16.mxu0 0
    %119 = vmatpush1.bf16.msra.mxu0 %v103
    %120 = vmatprep.subr.bf16.mxu0 0
    %121 = vmatpush1.bf16.msra.mxu0 %v102
    %122 = vmatprep.subr.bf16.mxu0 0
    %123 = vmatpush1.bf16.msra.mxu0 %v101
    %124 = vmatprep.subr.bf16.mxu0 0
    %125 = vmatpush1.bf16.msra.mxu0 %v100
    %126 = vmatprep.subr.bf16.mxu0 0
    %127 = vmatpush1.bf16.msra.mxu0 %v99
    %128 = vmatprep.subr.bf16.mxu0 0
    %129 = vmatpush1.bf16.msra.mxu0 %v98
    %130 = vmatprep.subr.bf16.mxu0 0
    %131 = vmatpush2.bf16.msra.mxu0 0
    %132 = vmatprep.subr.bf16.mxu0 0
    %133 = vmatpush2.bf16.msra.mxu0 0
    %134 = vmatprep.subr.bf16.mxu0 0
    %135 = vmatpush2.bf16.msra.mxu0 0
    %136 = vmatprep.subr.bf16.mxu0 0
    %137 = vmatpush2.bf16.msra.mxu0 0
    %138 = vmatprep.subr.bf16.mxu0 0
    %139 = vmatpush2.bf16.msra.mxu0 0
    %140 = vmatprep.subr.bf16.mxu0 0
    %141 = vmatpush2.bf16.msra.mxu0 0
    %142 = vmatprep.subr.bf16.mxu0 0
    %143 = vmatpush2.bf16.msra.mxu0 0
    %144 = vmatprep.subr.bf16.mxu0 0
    %145 = vmatpush2.bf16.msra.mxu0 0
    %146 = vmatprep.mubr.bf16.mxu0 0
    %147 = vmatmul.mubr.bf16.gmra.mxu0 %v49
    %v148 = vpop.f32.mrf.mxu0
    %v149 = vadd.f32 0.0, %v148
    %v150 = vpop.f32.mrf.mxu0
    %v151 = vpop.f32.mrf.mxu0
    %v152 = vpop.f32.mrf.mxu0
    %153 = vdwg.mxu0
    %v154 = vld [vmem:[%s2] sm:$0x1]
    %v156 = vlaneseq
    %v157 = vshrl.u32 %v156, 7
    %v158 = vsub.s32 0, %v157
    %v159 = vrot.slane %v154, %v158
    %v161 = vmul.f32 %v149, %v159
    %v162 = vld [vmem:[%s3] sm:$0x1]
    %v164 = vlaneseq
    %v165 = vshrl.u32 %v164, 7
    %v166 = vsub.s32 0, %v165
    %v167 = vrot.slane %v162, %v166
    %v169 = vadd.f32 %v161, %v167
    %s170 = sld [smem:[#allocation2]]
    %vm171 = vcmp.gt.f32.partialorder %v169, 0.0
    %v172 = vstv %s170
    %v173 = vmul.f32 %v172, %v169
    %v174 = vsel %vm171, %v169, %v173
    %v175 = vpack.c.bf16 %v174, %v174
    %176 = vst [vmem:[#allocation8] sm:$0xf] %v175
    // Predicated region
    $region30: #{tpu_custom_call.1} parent=1 // pred_check
      _
    $region31: #{tpu_custom_call.1} parent=1 // pred_check_branch
      %178 = sbr.rel (0) target = $region33
    $region32: #{tpu_custom_call.1} parent=1 // pred_region
      %s180 = ssub.s32 64, 64
      %181 = vsyncadd [#allocation5], %s180
      %s183 = sshll.u32 [#allocation8], 4
      %s184 = int_to_ptr.vmem [resolvable:$true] %s183
      %186 = dma.vmem_to_hbm [thread:$0]  %s184, 64, %s5, [#allocation5]
    $region33: #{tpu_custom_call.1} parent=1 // pred_fallthru
      _
    // Predicated region
    $region34: #{tpu_custom_call.1} parent=1 // pred_check
      _
    $region35: #{tpu_custom_call.1} parent=1 // pred_check_branch
      %188 = sbr.rel (0) target = $region37
    $region36: #{tpu_custom_call.1} parent=1 // pred_region
      %189 = dma.done [#allocation5], 64
    $region37: #{tpu_custom_call.1} parent=1 // pred_fallthru
      _
    %190 = vsyncpa [#allocation4], 1
    %191 = vsyncpa [#allocation7], 1
    %192 = vsyncpa [#allocation5], 1

// kernel: tpu_custom_call.1
$region0: #{tpu_custom_call.1}
  #allocation0 [shape = 'u32[]', space=smem, size = 0x4, offset = 0x4, fixed_abs, tag = 'smem constant byte address 0x4 - core index']
  #allocation1 [shape = 'u32[144,128]{1,0:T(1,128)}', space=vmem, size = 0x12000, scoped, tag = 'internal scratch']
  #allocation2 [shape = 'f32[1]{0:T(128)S(6)}', space=smem, size = 0x200, scoped, tag = 'scoped memory for tpu_custom_call.1']
  %s0 = inlined_call_operand.hbm [shape: bf16[8,128], index: 0, kind: input, shape index: {}]
  %s1 = inlined_call_operand.hbm [shape: bf16[128,128], index: 1, kind: input, shape index: {}]
  %s2 = inlined_call_operand.vmem [shape: f32[1,128], index: 2, kind: input, shape index: {}]
  %s3 = inlined_call_operand.vmem [shape: f32[1,128], index: 3, kind: input, shape index: {}]
  %s4 = inlined_call_operand.<no memory space> [shape: f32[1], index: 4, kind: input, shape index: {}]
  %s5 = inlined_call_operand.hbm [shape: bf16[8,128], index: 5, kind: output, shape index: {}]
  %s6 = sld [smem:[#allocation0]]
  $region38: #{tpu_custom_call.1} parent=0
    _
  %s8 = ssub.s32 1, %s6
  %s9 = scalar_select 0, %s8, %s6
  %10 = sst [smem:[#allocation2]] %s4
  $region1: #{tpu_custom_call.1} parent=0
    #allocation3 [shape = 'u8[2048]{0}', space=vmem, size = 0x800, scoped, tag = 'input window, operand 0, single buffered']
    #allocation4 [shape = 's32[1]{0}', space=sflag, size = 0x4, scoped, tag = 'scoped memory for tpu_custom_call.1']
    #allocation5 [shape = 's32[1]{0}', space=sflag, size = 0x4, scoped, tag = 'scoped memory for tpu_custom_call.1']
    #allocation6 [shape = 'u8[32768]{0}', space=vmem, size = 0x8000, scoped, tag = 'input window, operand 1, single buffered']
    #allocation7 [shape = 's32[1]{0}', space=sflag, size = 0x4, scoped, tag = 'scoped memory for tpu_custom_call.1']
    #allocation8 [shape = 'u8[2048]{0}', space=vmem, size = 0x800, scoped, tag = 'output window, operand 0, single buffered']
    %11 = vsyncpa [#allocation4], 0
    %12 = vsyncpa [#allocation7], 0
    %13 = vsyncpa [#allocation5], 0
    // Predicated region
    $region2: #{tpu_custom_call.1} parent=1 // pred_check
      _
    $region3: #{tpu_custom_call.1} parent=1 // pred_check_branch
      %15 = sbr.rel (0) target = $region5
    $region4: #{tpu_custom_call.1} parent=1 // pred_region
      %s17 = ssub.s32 64, 64
      %18 = vsyncadd [#allocation4], %s17
      %s20 = sshll.u32 [#allocation3], 4
      %s21 = int_to_ptr.vmem [resolvable:$true] %s20
      %23 = dma.hbm_to_vmem [thread:$0]  %s0, 64, %s21, [#allocation4]
    $region5: #{tpu_custom_call.1} parent=1 // pred_fallthru
      _
    // Predicated region
    $region6: #{tpu_custom_call.1} parent=1 // pred_check
      _
    $region7: #{tpu_custom_call.1} parent=1 // pred_check_branch
      %25 = sbr.rel (0) target = $region9
    $region8: #{tpu_custom_call.1} parent=1 // pred_region
      %s27 = ssub.s32 1024, 1024
      %28 = vsyncadd [#allocation7], %s27
      %s29 = sshll.u32 [#allocation6], 4
      %s30 = int_to_ptr.vmem [resolvable:$true] %s29
      %35 = dma.hbm_to_vmem [thread:$0]  %s1, 1024, %s30, [#allocation7], 64, 64, 4
    $region9: #{tpu_custom_call.1} parent=1 // pred_fallthru
      _
    // Predicated region
    $region10: #{tpu_custom_call.1} parent=1 // pred_check
      _
    $region11: #{tpu_custom_call.1} parent=1 // pred_check_branch
      %37 = sbr.rel (0) target = $region13
    $region12: #{tpu_custom_call.1} parent=1 // pred_region
      _
    $region13: #{tpu_custom_call.1} parent=1 // pred_fallthru
      _
    // Predicated region
    $region14: #{tpu_custom_call.1} parent=1 // pred_check
      _
    $region15: #{tpu_custom_call.1} parent=1 // pred_check_branch
      %39 = sbr.rel (0) target = $region17
    $region16: #{tpu_custom_call.1} parent=1 // pred_region
      _
    $region17: #{tpu_custom_call.1} parent=1 // pred_fallthru
      _
    // Predicated region
    $region18: #{tpu_custom_call.1} parent=1 // pred_check
      _
    $region19: #{tpu_custom_call.1} parent=1 // pred_check_branch
      %41 = sbr.rel (0) target = $region21
    $region20: #{tpu_custom_call.1} parent=1 // pred_region
      _
    $region21: #{tpu_custom_call.1} parent=1 // pred_fallthru
      _
    // Predicated region
    $region22: #{tpu_custom_call.1} parent=1 // pred_check
      _
    $region23: #{tpu_custom_call.1} parent=1 // pred_check_branch
      %43 = sbr.rel (0) target = $region25
    $region24: #{tpu_custom_call.1} parent=1 // pred_region
      %44 = dma.done [#allocation4], 64
    $region25: #{tpu_custom_call.1} parent=1 // pred_fallthru
      _
    // Predicated region
    $region26: #{tpu_custom_call.1} parent=1 // pred_check
      _
    $region27: #{tpu_custom_call.1} parent=1 // pred_check_branch
      %46 = sbr.rel (0) target = $region29
    $region28: #{tpu_custom_call.1} parent=1 // pred_region
      %47 = dma.done [#allocation7], 1024
    $region29: #{tpu_custom_call.1} parent=1 // pred_fallthru
      _
    %v49 = vld [vmem:[#allocation3] sm:$0xf]
    %v50 = vld [vmem:[#allocation6] sm:$0xf]
    %v51 = vld [vmem:[#allocation6 + $0x4] sm:$0xf]
    %v52 = vld [vmem:[#allocation6 + $0x8] sm:$0xf]
    %v53 = vld [vmem:[#allocation6 + $0xc] sm:$0xf]
    %v54 = vld [vmem:[#allocation6 + $0x10] sm:$0xf]
    %v55 = vld [vmem:[#allocation6 + $0x14] sm:$0xf]
    %v56 = vld [vmem:[#allocation6 + $0x18] sm:$0xf]
    %v57 = vld [vmem:[#allocation6 + $0x1c] sm:$0xf]
    %v58 = vld [vmem:[#allocation6 + $0x20] sm:$0xf]
    %v59 = vld [vmem:[#allocation6 + $0x24] sm:$0xf]
    %v60 = vld [vmem:[#allocation6 + $0x28] sm:$0xf]
    %v61 = vld [vmem:[#allocation6 + $0x2c] sm:$0xf]
    %v62 = vld [vmem:[#allocation6 + $0x30] sm:$0xf]
    %v63 = vld [vmem:[#allocation6 + $0x34] sm:$0xf]
    %v64 = vld [vmem:[#allocation6 + $0x38] sm:$0xf]
    %v65 = vld [vmem:[#allocation6 + $0x3c] sm:$0xf]
    %v82 = vunpack.c.l.b16 %v50
    %v83 = vunpack.c.l.b16 %v51
    %v84 = vunpack.c.l.b16 %v52
    %v85 = vunpack.c.l.b16 %v53
    %v86 = vunpack.c.l.b16 %v54
    %v87 = vunpack.c.l.b16 %v55
    %v88 = vunpack.c.l.b16 %v56
    %v89 = vunpack.c.l.b16 %v57
    %v90 = vunpack.c.l.b16 %v58
    %v91 = vunpack.c.l.b16 %v59
    %v92 = vunpack.c.l.b16 %v60
    %v93 = vunpack.c.l.b16 %v61
    %v94 = vunpack.c.l.b16 %v62
    %v95 = vunpack.c.l.b16 %v63
    %v96 = vunpack.c.l.b16 %v64
    %v97 = vunpack.c.l.b16 %v65
    %v98 = vpack.c.b16 %v83, %v82
    %v99 = vpack.c.b16 %v85, %v84
    %v100 = vpack.c.b16 %v87, %v86
    %v101 = vpack.c.b16 %v89, %v88
    %v102 = vpack.c.b16 %v91, %v90
    %v103 = vpack.c.b16 %v93, %v92
    %v104 = vpack.c.b16 %v95, %v94
    %v105 = vpack.c.b16 %v97, %v96
    %114 = vmatprep.subr.bf16.mxu0 0
    %115 = vmatpush1.bf16.msra.mxu0 %v105
    %116 = vmatprep.subr.bf16.mxu0 0
    %117 = vmatpush1.bf16.msra.mxu0 %v104
    %118 = vmatprep.subr.bf16.mxu0 0
    %119 = vmatpush1.bf16.msra.mxu0 %v103
    %120 = vmatprep.subr.bf16.mxu0 0
    %121 = vmatpush1.bf16.msra.mxu0 %v102
    %122 = vmatprep.subr.bf16.mxu0 0
    %123 = vmatpush1.bf16.msra.mxu0 %v101
    %124 = vmatprep.subr.bf16.mxu0 0
    %125 = vmatpush1.bf16.msra.mxu0 %v100
    %126 = vmatprep.subr.bf16.mxu0 0
    %127 = vmatpush1.bf16.msra.mxu0 %v99
    %128 = vmatprep.subr.bf16.mxu0 0
    %129 = vmatpush1.bf16.msra.mxu0 %v98
    %130 = vmatprep.subr.bf16.mxu0 0
    %131 = vmatpush2.bf16.msra.mxu0 0
    %132 = vmatprep.subr.bf16.mxu0 0
    %133 = vmatpush2.bf16.msra.mxu0 0
    %134 = vmatprep.subr.bf16.mxu0 0
    %135 = vmatpush2.bf16.msra.mxu0 0
    %136 = vmatprep.subr.bf16.mxu0 0
    %137 = vmatpush2.bf16.msra.mxu0 0
    %138 = vmatprep.subr.bf16.mxu0 0
    %139 = vmatpush2.bf16.msra.mxu0 0
    %140 = vmatprep.subr.bf16.mxu0 0
    %141 = vmatpush2.bf16.msra.mxu0 0
    %142 = vmatprep.subr.bf16.mxu0 0
    %143 = vmatpush2.bf16.msra.mxu0 0
    %144 = vmatprep.subr.bf16.mxu0 0
    %145 = vmatpush2.bf16.msra.mxu0 0
    %146 = vmatprep.mubr.bf16.mxu0 0
    %147 = vmatmul.mubr.bf16.gmra.mxu0 %v49
    %v148 = vpop.f32.mrf.mxu0
    %v149 = vadd.f32 0.0, %v148
    %v150 = vpop.f32.mrf.mxu0
    %v151 = vpop.f32.mrf.mxu0
    %v152 = vpop.f32.mrf.mxu0
    %153 = vdwg.mxu0
    %v154 = vld [vmem:[%s2] sm:$0x1]
    %v156 = vlaneseq
    %v157 = vshrl.u32 %v156, 7
    %v158 = vsub.s32 0, %v157
    %v159 = vrot.slane %v154, %v158
    %v161 = vmul.f32 %v149, %v159
    %v162 = vld [vmem:[%s3] sm:$0x1]
    %v164 = vlaneseq
    %v165 = vshrl.u32 %v164, 7
    %v166 = vsub.s32 0, %v165
    %v167 = vrot.slane %v162, %v166
    %v169 = vadd.f32 %v161, %v167
    %s170 = sld [smem:[#allocation2]]
    %vm171 = vcmp.gt.f32.partialorder %v169, 0.0
    %v172 = vstv %s170
    %v173 = vmul.f32 %v172, %v169
    %v174 = vsel %vm171, %v169, %v173
    %v175 = vpack.c.bf16 %v174, %v174
    %176 = vst [vmem:[#allocation8] sm:$0xf] %v175
    // Predicated region
    $region30: #{tpu_custom_call.1} parent=1 // pred_check
      _
    $region31: #{tpu_custom_call.1} parent=1 // pred_check_branch
      %178 = sbr.rel (0) target = $region33
    $region32: #{tpu_custom_call.1} parent=1 // pred_region
      %s180 = ssub.s32 64, 64
      %181 = vsyncadd [#allocation5], %s180
      %s183 = sshll.u32 [#allocation8], 4
      %s184 = int_to_ptr.vmem [resolvable:$true] %s183
      %186 = dma.vmem_to_hbm [thread:$0]  %s184, 64, %s5, [#allocation5]
    $region33: #{tpu_custom_call.1} parent=1 // pred_fallthru
      _
    // Predicated region
    $region34: #{tpu_custom_call.1} parent=1 // pred_check
      _
    $region35: #{tpu_custom_call.1} parent=1 // pred_check_branch
      %188 = sbr.rel (0) target = $region37
    $region36: #{tpu_custom_call.1} parent=1 // pred_region
      %189 = dma.done [#allocation5], 64
    $region37: #{tpu_custom_call.1} parent=1 // pred_fallthru
      _
    %190 = vsyncpa [#allocation4], 1
    %191 = vsyncpa [#allocation7], 1
    %192 = vsyncpa [#allocation5], 1

</llo_original>
